<compile_context>
chip_gen: v5e
topology: v5e:2x2
jax: 0.10.0
libtpu: 0.0.40
codegen_flags: <defaults>
</compile_context>

<pallas_src>
import functools

import jax
import jax.numpy as jnp
from jax.experimental import pallas as pl
from jax.experimental.pallas import tpu as pltpu


def residual_block_kernel(x_ref, w_ref, params_ref, o_ref, *, d_out, d_pad):
    # Single fused MXU matmul: y = x @ [W1_pad | W2_pad], f32 accumulation.
    y = jnp.dot(x_ref[...], w_ref[...], preferred_element_type=jnp.float32)
    y = y + params_ref[0:1, :]                      # fused bias row [b1_pad | b2_pad] (f32)

    h = y[:, :d_pad]                                # block path (padded lanes exactly 0)
    sc = y[:, d_pad:]                               # shortcut path (padded lanes exactly 0)

    # LayerNorm over the true d_out features (eps=1e-5, elementwise affine).
    # Stable two-pass form: padded lanes contribute exact zeros to the mean; mask them out of the
    # centered sum-of-squares so variance only covers the real features.
    inv_d = 1.0 / d_out
    mean = jnp.sum(h, axis=-1, keepdims=True) * inv_d
    centered = h - mean
    if d_pad != d_out:
        valid = jax.lax.broadcasted_iota(jnp.int32, (1, d_pad), 1) < d_out
        centered = jnp.where(valid, centered, 0.0)
    var = jnp.sum(centered * centered, axis=-1, keepdims=True) * inv_d

    gamma = params_ref[1:2, :d_pad]                 # zero on padded lanes
    beta = params_ref[1:2, d_pad:]                  # zero on padded lanes
    h_norm = centered * jax.lax.rsqrt(var + 1e-5) * gamma + beta

    act = jnp.maximum(h_norm, 0.0)                  # ReLU; Dropout is identity in eval mode
    o_ref[...] = (act + sc).astype(o_ref.dtype)


def _min_sublane_tile(*dtypes):
    # (8,128) min tile for 32-bit, (16,128) for 16-bit, (32,128) for 8-bit types.
    it = min(jnp.dtype(d).itemsize for d in dtypes)
    return {4: 8, 2: 16, 1: 32}.get(it, 8)


def _pick_tile_n(n, d_in, d_pad, x_itemsize, out_itemsize, resident_bytes, min_tile):
    """Largest sublane-friendly batch tile whose double-buffered x/out tiles (+ f32 intermediates)
    fit a conservative VMEM budget, preferring enough grid steps for software pipelining."""
    budget = 48 << 20  # conservative: fits v7x 64 MiB physical VMEM with headroom
    candidates = [c for c in (1024, 512, 256, 128, 64, 32, 16, 8) if c >= min_tile]

    def fits(c):
        per_step = (2 * c * d_in * x_itemsize          # double-buffered x tile
                    + 2 * c * d_pad * out_itemsize     # double-buffered out tile
                    + 4 * c * 2 * d_pad * 4)           # rough f32 intermediates (y, centered, ...)
        return resident_bytes + per_step <= budget

    # Prefer >= 4 grid steps with big tiles, then >= 2, then whatever fits.
    for min_steps, floor in ((4, 128), (2, 64), (1, min_tile)):
        for c in candidates:
            if c < floor:
                continue
            if fits(c) and pl.cdiv(n, c) >= min_steps:
                return c
    for c in reversed(candidates):                    # smallest that fits
        if fits(c):
            return c
    return min_tile


def pack_residual_block_params(w1, b1, gamma, beta, w2, b2, *, weight_dtype=None):
    """Precompute the fused weight slab and params slab ONCE per parameter set (hoisted out of
    the per-call hot path).  w1/w2: (D_in, D_out) (already transposed from PyTorch's (out, in));
    b1/b2/gamma/beta: (1, D_out).  If input_dim == output_dim the PyTorch shortcut is Identity;
    pass w2 = I, b2 = 0.  Set weight_dtype=jnp.bfloat16 (matching x) for the native bf16 MXU path."""
    d_in, d_out = w1.shape
    d_pad = ((d_out + 127) // 128) * 128              # lane-dense width
    pad = d_pad - d_out
    wdt = jnp.dtype(weight_dtype) if weight_dtype is not None else jnp.dtype(w1.dtype)

    w = jnp.concatenate(
        [jnp.pad(w1, ((0, 0), (0, pad))), jnp.pad(w2, ((0, 0), (0, pad)))],
        axis=1).astype(wdt)
    params = jnp.concatenate(
        [jnp.concatenate([jnp.pad(b1, ((0, 0), (0, pad))),
                          jnp.pad(b2, ((0, 0), (0, pad)))], axis=1),
         jnp.concatenate([jnp.pad(gamma, ((0, 0), (0, pad))),
                          jnp.pad(beta, ((0, 0), (0, pad)))], axis=1)],
        axis=0).astype(jnp.float32)                   # LN/bias math stays f32
    return w, params, d_out


def residual_block_packed(x, w, params, d_out, *, tile_n=None, out_dtype=None,
                          return_padded=False):
    """x: (N, D_in). w/params from pack_residual_block_params. Returns (N, D_out) in out_dtype
    (defaults to x.dtype), or the padded (N, D_pad) buffer if return_padded=True (skips the
    post-kernel slice copy; padded lanes are exact zeros)."""
    n, d_in = x.shape
    two_d_pad = w.shape[1]
    d_pad = two_d_pad // 2
    out_dtype = jnp.dtype(out_dtype) if out_dtype is not None else jnp.dtype(x.dtype)

    x_isz = jnp.dtype(x.dtype).itemsize
    out_isz = out_dtype.itemsize
    resident_bytes = w.size * jnp.dtype(w.dtype).itemsize + params.size * 4
    min_tile = _min_sublane_tile(x.dtype, out_dtype)

    if tile_n is None:
        tile_n = _pick_tile_n(n, d_in, d_pad, x_isz, out_isz, resident_bytes, min_tile)
    tile_n = max(tile_n, min_tile)

    # Pad N up to a multiple of tile_n (no divisibility assert; padded rows are sliced off).
    n_pad = pl.cdiv(n, tile_n) * tile_n
    if n_pad != n:
        x = jnp.pad(x, ((0, n_pad - n), (0, 0)))
    grid_n = n_pad // tile_n

    # Explicit VMEM budget: single-buffered resident weight/params + double-buffered x/out tiles
    # + rough f32 intermediates, with headroom.
    footprint = (resident_bytes
                 + 2 * tile_n * d_in * x_isz
                 + 2 * tile_n * d_pad * out_isz
                 + 4 * tile_n * two_d_pad * 4)
    vmem_limit = min(max(int(footprint * 1.25), 32 << 20), 100 << 20)

    cost = pl.CostEstimate(
        flops=2 * n_pad * d_in * two_d_pad,
        transcendentals=n_pad,                                   # one rsqrt per row
        bytes_accessed=(n_pad * d_in * x_isz + resident_bytes + n_pad * d_pad * out_isz))

    kernel = functools.partial(residual_block_kernel, d_out=d_out, d_pad=d_pad)
    const = lambda i: (0, 0)

    out = pl.pallas_call(
        kernel,
        out_shape=jax.ShapeDtypeStruct((n_pad, d_pad), out_dtype),
        grid_spec=pltpu.PrefetchScalarGridSpec(
            num_scalar_prefetch=0,
            grid=(grid_n,),
            in_specs=[
                pl.BlockSpec((tile_n, d_in), lambda i: (i, 0)),         # x tile (pipelined)
                pl.BlockSpec((d_in, two_d_pad), const,
                             pipeline_mode=pl.Buffered(1)),             # [W1|W2] resident, 1-buffered
                pl.BlockSpec((2, two_d_pad), const,
                             pipeline_mode=pl.Buffered(1)),             # [b1|b2];[gamma|beta]
            ],
            out_specs=pl.BlockSpec((tile_n, d_pad), lambda i: (i, 0)),
        ),
        compiler_params=pltpu.CompilerParams(
            dimension_semantics=("parallel",),
            vmem_limit_bytes=vmem_limit),
        cost_estimate=cost,
        # TODO(synk): for very large D_in (>~2K, earlier on v7x) add a trailing "arbitrary" K grid
        # axis with a (tile_n, 2*D_pad) f32 VMEM accumulator (pl.when init/finalize); not needed
        # at these sizes where the kernel is purely HBM-bandwidth bound.
    )(x, w, params)

    if return_padded:
        return out if n_pad == n else out[:n]
    return out[:n, :d_out]


def residual_block(x, w1, b1, gamma, beta, w2, b2, *, tile_n=None, out_dtype=None,
                   weight_dtype=None, return_padded=False):
    """Convenience wrapper: packs params (do this once per parameter set in real use) and runs."""
    w, params, d_out = pack_residual_block_params(
        w1, b1, gamma, beta, w2, b2, weight_dtype=weight_dtype)
    return residual_block_packed(x, w, params, d_out, tile_n=tile_n, out_dtype=out_dtype,
                                 return_padded=return_padded)


def reference(x, w1, b1, gamma, beta, w2, b2):
    h = x @ w1 + b1
    mean = h.mean(-1, keepdims=True)
    var = ((h - mean) ** 2).mean(-1, keepdims=True)
    hn = (h - mean) / jnp.sqrt(var + 1e-5) * gamma + beta
    act = jnp.maximum(hn, 0.0)
    return act + (x @ w2 + b2)


if __name__ == "__main__":
    key = jax.random.PRNGKey(0)
    N, D_in, D_out = 256, 32, 64   # input_dim != output_dim -> shortcut is a Linear

    k = jax.random.split(key, 5)
    bound = D_in ** -0.5           # roughly PyTorch Linear init scale
    x = jax.random.normal(k[0], (N, D_in), dtype=jnp.float32)
    w1 = jax.random.uniform(k[1], (D_in, D_out), jnp.float32, -bound, bound)
    b1 = jax.random.uniform(k[2], (1, D_out), jnp.float32, -bound, bound)
    gamma = jnp.ones((1, D_out), jnp.float32)   # nn.LayerNorm default weight
    beta = jnp.zeros((1, D_out), jnp.float32)   # nn.LayerNorm default bias
    w2 = jax.random.uniform(k[3], (D_in, D_out), jnp.float32, -bound, bound)
    b2 = jax.random.uniform(k[4], (1, D_out), jnp.float32, -bound, bound)

    # Pack once (hoisted out of the hot path), then run the kernel.
    w_packed, params_packed, d_out = pack_residual_block_params(w1, b1, gamma, beta, w2, b2)
    out = residual_block_packed(x, w_packed, params_packed, d_out)
    jax.block_until_ready(out)

    ref = reference(x, w1, b1, gamma, beta, w2, b2)
    assert out.shape == (N, D_out)
    assert out.dtype == x.dtype
    assert jnp.allclose(out, ref, atol=1e-4, rtol=1e-4)

    # Also exercise an awkward batch size (N padding path) for robustness.
    x_odd = x[:200]
    out_odd = residual_block_packed(x_odd, w_packed, params_packed, d_out)
    jax.block_until_ready(out_odd)
    assert out_odd.shape == (200, D_out)
    assert jnp.allclose(out_odd, ref[:200], atol=1e-4, rtol=1e-4)

    # TODO(synk): nn.Dropout in training mode (random masking via pltpu.prng_*) is not
    # implemented; eval-mode identity is used, matching model.eval() inference semantics.
    print("KERNEL_OK")
</pallas_src>

<mosaic_0001>
module attributes {stable_mosaic.version = 11 : i64} {
  func.func @residual_block_kernel(%arg0: i32, %arg1: memref<128x32xf32, #tpu.memory_space<vmem>>, %arg2: memref<32x256xf32, #tpu.memory_space<vmem>>, %arg3: memref<2x256xf32, #tpu.memory_space<vmem>>, %arg4: memref<128x128xf32, #tpu.memory_space<vmem>>) attributes {dimension_semantics = [#tpu.dimension_semantics<parallel>], iteration_bounds = array<i64: 2>, scalar_prefetch = 0 : i64, scratch_operands = 0 : i64, tpu.core_type = #tpu.core_type<tc>, window_params = [{transform_indices = @transform_0, window_bounds = array<i64: 128, 32>}, {pipeline_mode = #tpu.pipeline_mode<synchronous>, transform_indices = @transform_1, window_bounds = array<i64: 32, 256>}, {pipeline_mode = #tpu.pipeline_mode<synchronous>, transform_indices = @transform_2, window_bounds = array<i64: 2, 256>}, {transform_indices = @transform_3, window_bounds = array<i64: 128, 128>}]} {
    %c0 = arith.constant 0 : index
    %c0_0 = arith.constant 0 : index
    %0 = vector.load %arg1[%c0, %c0_0] : memref<128x32xf32, #tpu.memory_space<vmem>>, vector<128x32xf32>
    %c0_1 = arith.constant 0 : index
    %c0_2 = arith.constant 0 : index
    %1 = vector.load %arg2[%c0_1, %c0_2] : memref<32x256xf32, #tpu.memory_space<vmem>>, vector<32x256xf32>
    %cst = arith.constant dense<0.000000e+00> : vector<128x256xf32>
    %2 = tpu.matmul %0, %1, %cst {dimension_numbers = #tpu.dot_dimension_numbers<[1], [0], [0], [1], [0, 0, 1, 1], [], []>} : vector<128x32xf32>, vector<32x256xf32>, vector<128x256xf32> -> vector<128x256xf32>
    %c0_3 = arith.constant 0 : index
    %c0_4 = arith.constant 0 : index
    %3 = vector.load %arg3[%c0_3, %c0_4] : memref<2x256xf32, #tpu.memory_space<vmem>>, vector<1x256xf32>
    %4 = vector.broadcast %3 : vector<1x256xf32> to vector<128x256xf32>
    %5 = arith.addf %2, %4 : vector<128x256xf32>
    %6 = vector.extract_strided_slice %5 {offsets = [0, 0], sizes = [128, 128], strides = [1, 1]} : vector<128x256xf32> to vector<128x128xf32>
    %7 = vector.extract_strided_slice %5 {offsets = [0, 128], sizes = [128, 128], strides = [1, 1]} : vector<128x256xf32> to vector<128x128xf32>
    %cst_5 = arith.constant dense<0.000000e+00> : vector<128xf32>
    %8 = vector.multi_reduction <add>, %6, %cst_5 [1] : vector<128x128xf32> to vector<128xf32>
    %9 = vector.shape_cast %8 : vector<128xf32> to vector<128x1xf32>
    %cst_6 = arith.constant 1.562500e-02 : f32
    %10 = vector.broadcast %cst_6 : f32 to vector<128x1xf32>
    %11 = arith.mulf %9, %10 : vector<128x1xf32>
    %12 = vector.broadcast %11 : vector<128x1xf32> to vector<128x128xf32>
    %13 = arith.subf %6, %12 : vector<128x128xf32>
    %14 = tpu.iota {dimensions = array<i32: 1>} : vector<1x128xi32>
    %c64_i32 = arith.constant 64 : i32
    %15 = vector.broadcast %c64_i32 : i32 to vector<1x128xi32>
    %16 = arith.cmpi slt, %14, %15 : vector<1x128xi32>
    %cst_7 = arith.constant 0.000000e+00 : f32
    %17 = vector.shape_cast %16 : vector<1x128xi1> to vector<1x128xi1>
    %18 = vector.broadcast %17 : vector<1x128xi1> to vector<128x128xi1>
    %19 = vector.broadcast %cst_7 : f32 to vector<128x128xf32>
    %20 = arith.select %18, %13, %19 : vector<128x128xi1>, vector<128x128xf32>
    %21 = arith.mulf %20, %20 : vector<128x128xf32>
    %cst_8 = arith.constant dense<0.000000e+00> : vector<128xf32>
    %22 = vector.multi_reduction <add>, %21, %cst_8 [1] : vector<128x128xf32> to vector<128xf32>
    %23 = vector.shape_cast %22 : vector<128xf32> to vector<128x1xf32>
    %cst_9 = arith.constant 1.562500e-02 : f32
    %24 = vector.broadcast %cst_9 : f32 to vector<128x1xf32>
    %25 = arith.mulf %23, %24 : vector<128x1xf32>
    %c1 = arith.constant 1 : index
    %c0_10 = arith.constant 0 : index
    %26 = vector.load %arg3[%c1, %c0_10] : memref<2x256xf32, #tpu.memory_space<vmem>>, vector<1x128xf32>
    %c1_11 = arith.constant 1 : index
    %c128 = arith.constant 128 : index
    %27 = vector.load %arg3[%c1_11, %c128] : memref<2x256xf32, #tpu.memory_space<vmem>>, vector<1x128xf32>
    %cst_12 = arith.constant 9.99999974E-6 : f32
    %28 = vector.broadcast %cst_12 : f32 to vector<128x1xf32>
    %29 = arith.addf %25, %28 : vector<128x1xf32>
    %30 = math.rsqrt %29 : vector<128x1xf32>
    %31 = vector.broadcast %30 : vector<128x1xf32> to vector<128x128xf32>
    %32 = arith.mulf %20, %31 : vector<128x128xf32>
    %33 = vector.broadcast %26 : vector<1x128xf32> to vector<128x128xf32>
    %34 = arith.mulf %32, %33 : vector<128x128xf32>
    %35 = vector.broadcast %27 : vector<1x128xf32> to vector<128x128xf32>
    %36 = arith.addf %34, %35 : vector<128x128xf32>
    %cst_13 = arith.constant 0.000000e+00 : f32
    %37 = vector.broadcast %cst_13 : f32 to vector<128x128xf32>
    %38 = arith.maximumf %36, %37 : vector<128x128xf32>
    %39 = arith.addf %38, %7 : vector<128x128xf32>
    %c0_14 = arith.constant 0 : index
    %c0_15 = arith.constant 0 : index
    %40 = vector.load %arg4[%c0_14, %c0_15] : memref<128x128xf32, #tpu.memory_space<vmem>>, vector<128x128xf32>
    tpu.vector_store %arg4[%c0_14, %c0_15], %39 {strides = array<i32>} : memref<128x128xf32, #tpu.memory_space<vmem>>, vector<128x128xf32>,
    return
  }
  func.func @transform_0(%arg0: i32) -> (i32, i32) {
    %c0_i32 = arith.constant 0 : i32
    %c0_i32_0 = arith.constant 0 : i32
    return %arg0, %c0_i32 : i32, i32
  }
  func.func @transform_1(%arg0: i32) -> (i32, i32) {
    %c0_i32 = arith.constant 0 : i32
    %c0_i32_0 = arith.constant 0 : i32
    %c0_i32_1 = arith.constant 0 : i32
    return %c0_i32, %c0_i32_0 : i32, i32
  }
  func.func @transform_2(%arg0: i32) -> (i32, i32) {
    %c0_i32 = arith.constant 0 : i32
    %c0_i32_0 = arith.constant 0 : i32
    %c0_i32_1 = arith.constant 0 : i32
    return %c0_i32, %c0_i32_0 : i32, i32
  }
  func.func @transform_3(%arg0: i32) -> (i32, i32) {
    %c0_i32 = arith.constant 0 : i32
    %c0_i32_0 = arith.constant 0 : i32
    return %arg0, %c0_i32 : i32, i32
  }
}

</mosaic_0001>

<llo_original>
// kernel: tpu_custom_call.1
$region0: #{tpu_custom_call.1}
  #allocation0 [shape = 'u32[]', space=smem, size = 0x4, offset = 0x4, fixed_abs, tag = 'smem constant byte address 0x4 - core index']
  #allocation1 [shape = 'u32[72,128]{1,0:T(1,128)}', space=vmem, size = 0x9000, scoped, tag = 'internal scratch']
  %s0 = inlined_call_operand.vmem [shape: f32[256,32], index: 0, kind: input, shape index: {}]
  %s1 = inlined_call_operand.vmem [shape: f32[32,256], index: 1, kind: input, shape index: {}]
  %s2 = inlined_call_operand.vmem [shape: f32[2,256], index: 2, kind: input, shape index: {}]
  %s3 = inlined_call_operand.hbm [shape: f32[256,128], index: 3, kind: output, shape index: {}]
  %s4 = sld [smem:[#allocation0]]
  $region45: #{tpu_custom_call.1} parent=0
    _
  %s6 = ssub.s32 1, %s4
  %s7 = scalar_select 0, %s6, %s4
  $region1: #{tpu_custom_call.1} parent=0
    #allocation2 [shape = 'u8[131072]{0}', space=vmem, size = 0x20000, scoped, tag = 'output window, operand 0']
    #allocation3 [shape = 's32[2]{0}', space=sflag, size = 0x8, scoped, tag = 'scoped memory for tpu_custom_call.1']
    %8 = vsyncpa [#allocation3], 0
    %s9 = scalar_lea.sflag [#allocation3], 1
    %10 = vsyncpa %s9, 0
    loop: start=0, step=1, limit=4
    $region2: #{tpu_custom_call.1} parent=1 // loop_pre_header
      _
    $region3: #{tpu_custom_call.1} parent=1 // loop_header
      %s12 = sphi 0, %s16
      %p13 = scmp.ge.s32.totalorder %s12, 4
      %s22 = sphi 0, %s24
      %s25 = sphi 0, %s22
      %s26 = sphi 0, %s25
      %s42 = sphi 0, %s26
      %s46 = sphi 0, %s46
      %s48 = sphi 0, %s46
      %s49 = sphi 0, %s48
      %s63 = sphi 0, %s49
      %s67 = sphi 0, %s67
      %s69 = sphi 0, %s67
      %s70 = sphi 0, %s69
      %s84 = sphi 0, %s70
      %s90 = sphi 0, %s92
      %s93 = sphi 0, %s90
      %s94 = sphi 0, %s93
      %s110 = sphi 0, %s94
    $region4: #{tpu_custom_call.1} parent=1 // loop_header_branch
      %15 = sbr.rel (%p13) target = $region8
    $region5: #{tpu_custom_call.1} parent=1 // loop_body
      %s17 = ssub.s32 %s12, 1
      %s18 = ssub.s32 %s12, 2
      %s19 = sadd.s32 %s12, 1
      %s20 = ssub.s32 %s12, %s19
      %p21 = scmp.eq.s32.totalorder %s20, 0
      %s23 = sadd.s32 %s22, 1
      %s24 = scalar_select %p21, %s22, %s23
      %p27 = pneg %p21
      %p28 = scmp.eq.s32.totalorder %s12, 1
      %p29 = por %p27, %p28
      %p30 = scmp.ne.s32.totalorder %s22, %s25
      %p31 = scmp.eq.s32.totalorder %s12, 0
      %p32 = por %p30, %p31
      %p33 = scmp.ne.s32.totalorder %s22, %s25
      %p34 = scmp.eq.s32.totalorder %s17, 1
      %p35 = por %p33, %p34
      %p36 = scmp.ne.s32.totalorder %s25, %s26
      %p37 = scmp.eq.s32.totalorder %s17, 0
      %p38 = por %p36, %p37
      %p39 = scmp.ne.s32.totalorder %s25, %s26
      %p40 = scmp.eq.s32.totalorder %s18, 1
      %p41 = por %p39, %p40
      %p43 = scmp.ne.s32.totalorder %s26, %s42
      %p44 = scmp.eq.s32.totalorder %s18, 0
      %p45 = por %p43, %p44
      %s47 = sadd.s32 %s46, 1
      %p50 = scmp.eq.s32.totalorder %s12, 1
      %p51 = scmp.ne.s32.totalorder %s46, %s48
      %p52 = scmp.eq.s32.totalorder %s12, 0
      %p53 = por %p51, %p52
      %p54 = scmp.ne.s32.totalorder %s46, %s48
      %p55 = scmp.eq.s32.totalorder %s17, 1
      %p56 = por %p54, %p55
      %p57 = scmp.ne.s32.totalorder %s48, %s49
      %p58 = scmp.eq.s32.totalorder %s17, 0
      %p59 = por %p57, %p58
      %p60 = scmp.ne.s32.totalorder %s48, %s49
      %p61 = scmp.eq.s32.totalorder %s18, 1
      %p62 = por %p60, %p61
      %p64 = scmp.ne.s32.totalorder %s49, %s63
      %p65 = scmp.eq.s32.totalorder %s18, 0
      %p66 = por %p64, %p65
      %s68 = sadd.s32 %s67, 1
      %p71 = scmp.eq.s32.totalorder %s12, 1
      %p72 = scmp.ne.s32.totalorder %s67, %s69
      %p73 = scmp.eq.s32.totalorder %s12, 0
      %p74 = por %p72, %p73
      %p75 = scmp.ne.s32.totalorder %s67, %s69
      %p76 = scmp.eq.s32.totalorder %s17, 1
      %p77 = por %p75, %p76
      %p78 = scmp.ne.s32.totalorder %s69, %s70
      %p79 = scmp.eq.s32.totalorder %s17, 0
      %p80 = por %p78, %p79
      %p81 = scmp.ne.s32.totalorder %s69, %s70
      %p82 = scmp.eq.s32.totalorder %s18, 1
      %p83 = por %p81, %p82
      %p85 = scmp.ne.s32.totalorder %s70, %s84
      %p86 = scmp.eq.s32.totalorder %s18, 0
      %p87 = por %p85, %p86
      %s88 = ssub.s32 %s12, %s19
      %p89 = scmp.eq.s32.totalorder %s88, 0
      %s91 = sadd.s32 %s90, 1
      %s92 = scalar_select %p89, %s90, %s91
      %p95 = pneg %p89
      %p96 = scmp.eq.s32.totalorder %s12, 1
      %p97 = por %p95, %p96
      %p98 = scmp.ne.s32.totalorder %s90, %s93
      %p99 = scmp.eq.s32.totalorder %s12, 0
      %p100 = por %p98, %p99
      %p101 = scmp.ne.s32.totalorder %s90, %s93
      %p102 = scmp.eq.s32.totalorder %s17, 1
      %p103 = por %p101, %p102
      %p104 = scmp.ne.s32.totalorder %s93, %s94
      %p105 = scmp.eq.s32.totalorder %s17, 0
      %p106 = por %p104, %p105
      %p107 = scmp.ne.s32.totalorder %s93, %s94
      %p108 = scmp.eq.s32.totalorder %s18, 1
      %p109 = por %p107, %p108
      %p111 = scmp.ne.s32.totalorder %s94, %s110
      %p112 = scmp.eq.s32.totalorder %s18, 0
      %p113 = por %p111, %p112
      %p114 = scmp.le.s32.totalorder 1, %s12
      %p115 = scmp.lt.s32.totalorder %s12, 3
      %p116 = pnand %p114, %p115
      %p117 = pneg %p116
      // Predicated region
      $region9: #{tpu_custom_call.1} parent=5 // pred_check
        _
      $region10: #{tpu_custom_call.1} parent=5 // pred_check_branch
        %119 = sbr.rel (%p116) target = $region12
      $region11: #{tpu_custom_call.1} parent=5 // pred_region
        %s120 = ssub.s32 %s12, 1
        // Predicated region
        $region13: #{tpu_custom_call.1} parent=11 // pred_check
          %p121 = pneg %p59
        $region14: #{tpu_custom_call.1} parent=11 // pred_check_branch
          %123 = sbr.rel (%p121) target = $region16
        $region15: #{tpu_custom_call.1} parent=11 // pred_region
          _
        $region16: #{tpu_custom_call.1} parent=11 // pred_fallthru
          _
        // Predicated region
        $region17: #{tpu_custom_call.1} parent=11 // pred_check
          %p124 = pneg %p80
        $region18: #{tpu_custom_call.1} parent=11 // pred_check_branch
          %126 = sbr.rel (%p124) target = $region20
        $region19: #{tpu_custom_call.1} parent=11 // pred_region
          _
        $region20: #{tpu_custom_call.1} parent=11 // pred_fallthru
          _
      $region12: #{tpu_custom_call.1} parent=5 // pred_fallthru
        _
      %p127 = scmp.lt.s32.totalorder %s12, 2
      // Predicated region
      $region21: #{tpu_custom_call.1} parent=5 // pred_check
        %p128 = pneg %p127
      $region22: #{tpu_custom_call.1} parent=5 // pred_check_branch
        %130 = sbr.rel (%p128) target = $region24
      $region23: #{tpu_custom_call.1} parent=5 // pred_region
        // Predicated region
        $region25: #{tpu_custom_call.1} parent=23 // pred_check
          %p131 = pneg %p32
        $region26: #{tpu_custom_call.1} parent=23 // pred_check_branch
          %133 = sbr.rel (%p131) target = $region28
        $region27: #{tpu_custom_call.1} parent=23 // pred_region
          %s134 = smul.u32 16, %s12
          %p135 = scmp.lt.s32.totalorder %s134, 31
          %s136 = scalar_select %p135, %s134, 31
          %s137 = smul.addr %s136, 8
          %s138 = scalar_lea.vmem %s0, %s137
          %s139 = smul.u32 16, %s12
        $region28: #{tpu_custom_call.1} parent=23 // pred_fallthru
          _
      $region24: #{tpu_custom_call.1} parent=5 // pred_fallthru
        _
      %p140 = scmp.le.s32.totalorder 1, %s12
      %p141 = scmp.lt.s32.totalorder %s12, 3
      %p142 = pnand %p140, %p141
      %p143 = pneg %p142
      // Predicated region
      $region29: #{tpu_custom_call.1} parent=5 // pred_check
        _
      $region30: #{tpu_custom_call.1} parent=5 // pred_check_branch
        %145 = sbr.rel (%p142) target = $region32
      $region31: #{tpu_custom_call.1} parent=5 // pred_region
        %s146 = ssub.s32 %s12, 1
        %s147 = smul.u32 16, %s17
        %p148 = scmp.lt.s32.totalorder %s147, 31
        %s149 = scalar_select %p148, %s147, 31
        %s150 = smul.addr %s149, 8
        %s151 = scalar_lea.vmem %s0, %s150
        %p152 = pneg %p38
        %p153 = pneg %p35
        %p154 = pneg %p59
        %p155 = pneg %p56
        %p156 = pneg %p80
        %p157 = pneg %p77
        %p158 = pneg %p106
        %p159 = pneg %p103
        %s160 = sand.u32 %s93, 1
        %s161 = scalar_lea.sflag [#allocation3], %s160
        %s162 = sand.u32 %s93, 1
        %s163 = smul.addr %s162, 128
        %s164 = scalar_lea.vmem [#allocation2], %s163
        %s165 = smul.u32 16, %s17
        %p166 = scmp.lt.s32.totalorder %s165, 31
        %s167 = scalar_select %p166, %s165, 31
        %s168 = smul.addr %s167, 8
        %s169 = scalar_lea.vmem %s0, %s168
        %s170 = smul.u32 16, %s17
        %s171 = smul.u32 16, %s17
        %v172 = vld [vmem:[%s169] sm:$0xff]
        %v173 = vld [vmem:[%s169 + $0x8] sm:$0xff]
        %v174 = vld [vmem:[%s169 + $0x10] sm:$0xff]
        %v175 = vld [vmem:[%s169 + $0x18] sm:$0xff]
        %v176 = vld [vmem:[%s169 + $0x20] sm:$0xff]
        %v177 = vld [vmem:[%s169 + $0x28] sm:$0xff]
        %v178 = vld [vmem:[%s169 + $0x30] sm:$0xff]
        %v179 = vld [vmem:[%s169 + $0x38] sm:$0xff]
        %v180 = vld [vmem:[%s169 + $0x40] sm:$0xff]
        %v181 = vld [vmem:[%s169 + $0x48] sm:$0xff]
        %v182 = vld [vmem:[%s169 + $0x50] sm:$0xff]
        %v183 = vld [vmem:[%s169 + $0x58] sm:$0xff]
        %v184 = vld [vmem:[%s169 + $0x60] sm:$0xff]
        %v185 = vld [vmem:[%s169 + $0x68] sm:$0xff]
        %v186 = vld [vmem:[%s169 + $0x70] sm:$0xff]
        %v187 = vld [vmem:[%s169 + $0x78] sm:$0xff]
        %v188 = vld [vmem:[%s1] sm:$0xff]
        %v189 = vld [vmem:[%s1 + $0x8] sm:$0xff]
        %v190 = vld [vmem:[%s1 + $0x10] sm:$0xff]
        %v191 = vld [vmem:[%s1 + $0x18] sm:$0xff]
        %v192 = vld [vmem:[%s1 + $0x20] sm:$0xff]
        %v193 = vld [vmem:[%s1 + $0x28] sm:$0xff]
        %v194 = vld [vmem:[%s1 + $0x30] sm:$0xff]
        %v195 = vld [vmem:[%s1 + $0x38] sm:$0xff]
        %v196 = vld [vmem:[%s2] ss:$2 sm:$0x3]
        %v198 = vperm.slane %v196, 0
        %v199 = vperm.slane %v196, 1
        %vm202 = vcmask 261120
        %v204 = vsel %vm202, %v172, 0
        %v207 = vsel %vm202, %v173, 0
        %v210 = vsel %vm202, %v174, 0
        %v213 = vsel %vm202, %v175, 0
        %v216 = vsel %vm202, %v176, 0
        %v219 = vsel %vm202, %v177, 0
        %v222 = vsel %vm202, %v178, 0
        %v225 = vsel %vm202, %v179, 0
        %v228 = vsel %vm202, %v180, 0
        %v231 = vsel %vm202, %v181, 0
        %v234 = vsel %vm202, %v182, 0
        %v237 = vsel %vm202, %v183, 0
        %v240 = vsel %vm202, %v184, 0
        %v243 = vsel %vm202, %v185, 0
        %v246 = vsel %vm202, %v186, 0
        %v249 = vsel %vm202, %v187, 0
        %251 = vmatpush.msra.mxu0 0.0
        %252 = vmatpush.msra.mxu0 0.0
        %253 = vmatpush.msra.mxu0 0.0
        %254 = vmatpush.msra.mxu0 0.0
        %255 = vmatpush.msra.mxu0 0.0
        %256 = vmatpush.msra.mxu0 0.0
        %257 = vmatpush.msra.mxu0 0.0
        %258 = vmatpush.msra.mxu0 0.0
        %259 = vmatpush.msra.mxu0 0.0
        %260 = vmatpush.msra.mxu0 0.0
        %261 = vmatpush.msra.mxu0 0.0
        %262 = vmatpush.msra.mxu0 0.0
        %263 = vmatpush.msra.mxu0 %v194
        %264 = vmatpush.msra.mxu0 %v192
        %265 = vmatpush.msra.mxu0 %v190
        %266 = vmatpush.msra.mxu0 %v188
        %267 = vmatmul.f32.gmra.mxu0 %v204
        %v268 = vpop.f32.mrf.mxu0
        %v269 = vadd.f32 %v198, %v268
        %270 = vmatmul.f32.gmra.mxu0 %v207
        %v271 = vpop.f32.mrf.mxu0
        %v272 = vadd.f32 %v198, %v271
        %273 = vmatmul.f32.gmra.mxu0 %v210
        %v274 = vpop.f32.mrf.mxu0
        %v275 = vadd.f32 %v198, %v274
        %276 = vmatmul.f32.gmra.mxu0 %v213
        %v277 = vpop.f32.mrf.mxu0
        %v278 = vadd.f32 %v198, %v277
        %279 = vmatmul.f32.gmra.mxu0 %v216
        %v280 = vpop.f32.mrf.mxu0
        %v281 = vadd.f32 %v198, %v280
        %282 = vmatmul.f32.gmra.mxu0 %v219
        %v283 = vpop.f32.mrf.mxu0
        %v284 = vadd.f32 %v198, %v283
        %285 = vmatmul.f32.gmra.mxu0 %v222
        %v286 = vpop.f32.mrf.mxu0
        %v287 = vadd.f32 %v198, %v286
        %288 = vmatmul.f32.gmra.mxu0 %v225
        %v289 = vpop.f32.mrf.mxu0
        %v290 = vadd.f32 %v198, %v289
        %291 = vmatmul.f32.gmra.mxu0 %v228
        %v292 = vpop.f32.mrf.mxu0
        %v293 = vadd.f32 %v198, %v292
        %294 = vmatmul.f32.gmra.mxu0 %v231
        %v295 = vpop.f32.mrf.mxu0
        %v296 = vadd.f32 %v198, %v295
        %297 = vmatmul.f32.gmra.mxu0 %v234
        %v298 = vpop.f32.mrf.mxu0
        %v299 = vadd.f32 %v198, %v298
        %300 = vmatmul.f32.gmra.mxu0 %v237
        %v301 = vpop.f32.mrf.mxu0
        %v302 = vadd.f32 %v198, %v301
        %303 = vmatmul.f32.gmra.mxu0 %v240
        %v304 = vpop.f32.mrf.mxu0
        %v305 = vadd.f32 %v198, %v304
        %306 = vmatmul.f32.gmra.mxu0 %v243
        %v307 = vpop.f32.mrf.mxu0
        %v308 = vadd.f32 %v198, %v307
        %309 = vmatmul.f32.gmra.mxu0 %v246
        %v310 = vpop.f32.mrf.mxu0
        %v311 = vadd.f32 %v198, %v310
        %312 = vmatmul.f32.gmra.mxu0 %v249
        %v313 = vpop.f32.mrf.mxu0
        %v314 = vadd.f32 %v198, %v313
        %315 = vdwg.mxu0
        %316 = vmatpush.msra.mxu0 0.0
        %317 = vmatpush.msra.mxu0 0.0
        %318 = vmatpush.msra.mxu0 0.0
        %319 = vmatpush.msra.mxu0 0.0
        %320 = vmatpush.msra.mxu0 0.0
        %321 = vmatpush.msra.mxu0 0.0
        %322 = vmatpush.msra.mxu0 0.0
        %323 = vmatpush.msra.mxu0 0.0
        %324 = vmatpush.msra.mxu0 0.0
        %325 = vmatpush.msra.mxu0 0.0
        %326 = vmatpush.msra.mxu0 0.0
        %327 = vmatpush.msra.mxu0 0.0
        %328 = vmatpush.msra.mxu0 %v195
        %329 = vmatpush.msra.mxu0 %v193
        %330 = vmatpush.msra.mxu0 %v191
        %331 = vmatpush.msra.mxu0 %v189
        %332 = vmatmul.f32.gmra.mxu0 %v204
        %v333 = vpop.f32.mrf.mxu0
        %v334 = vadd.f32 %v199, %v333
        %335 = vmatmul.f32.gmra.mxu0 %v207
        %v336 = vpop.f32.mrf.mxu0
        %v337 = vadd.f32 %v199, %v336
        %338 = vmatmul.f32.gmra.mxu0 %v210
        %v339 = vpop.f32.mrf.mxu0
        %v340 = vadd.f32 %v199, %v339
        %341 = vmatmul.f32.gmra.mxu0 %v213
        %v342 = vpop.f32.mrf.mxu0
        %v343 = vadd.f32 %v199, %v342
        %344 = vmatmul.f32.gmra.mxu0 %v216
        %v345 = vpop.f32.mrf.mxu0
        %v346 = vadd.f32 %v199, %v345
        %347 = vmatmul.f32.gmra.mxu0 %v219
        %v348 = vpop.f32.mrf.mxu0
        %v349 = vadd.f32 %v199, %v348
        %350 = vmatmul.f32.gmra.mxu0 %v222
        %v351 = vpop.f32.mrf.mxu0
        %v352 = vadd.f32 %v199, %v351
        %353 = vmatmul.f32.gmra.mxu0 %v225
        %v354 = vpop.f32.mrf.mxu0
        %v355 = vadd.f32 %v199, %v354
        %356 = vmatmul.f32.gmra.mxu0 %v228
        %v357 = vpop.f32.mrf.mxu0
        %v358 = vadd.f32 %v199, %v357
        %359 = vmatmul.f32.gmra.mxu0 %v231
        %v360 = vpop.f32.mrf.mxu0
        %v361 = vadd.f32 %v199, %v360
        %362 = vmatmul.f32.gmra.mxu0 %v234
        %v363 = vpop.f32.mrf.mxu0
        %v364 = vadd.f32 %v199, %v363
        %365 = vmatmul.f32.gmra.mxu0 %v237
        %v366 = vpop.f32.mrf.mxu0
        %v367 = vadd.f32 %v199, %v366
        %368 = vmatmul.f32.gmra.mxu0 %v240
        %v369 = vpop.f32.mrf.mxu0
        %v370 = vadd.f32 %v199, %v369
        %371 = vmatmul.f32.gmra.mxu0 %v243
        %v372 = vpop.f32.mrf.mxu0
        %v373 = vadd.f32 %v199, %v372
        %374 = vmatmul.f32.gmra.mxu0 %v246
        %v375 = vpop.f32.mrf.mxu0
        %v376 = vadd.f32 %v199, %v375
        %377 = vmatmul.f32.gmra.mxu0 %v249
        %v378 = vpop.f32.mrf.mxu0
        %v379 = vadd.f32 %v199, %v378
        %380 = vdwg.mxu0
        %381 = vadd.xlane.f32.xlu0 %v269
        %v382 = vpop.xlane.xlu0 %381
        %383 = vadd.xlane.f32.xlu0 %v272
        %v384 = vpop.xlane.xlu0 %383
        %385 = vadd.xlane.f32.xlu0 %v275
        %v386 = vpop.xlane.xlu0 %385
        %387 = vadd.xlane.f32.xlu0 %v278
        %v388 = vpop.xlane.xlu0 %387
        %389 = vadd.xlane.f32.xlu0 %v281
        %v390 = vpop.xlane.xlu0 %389
        %391 = vadd.xlane.f32.xlu0 %v284
        %v392 = vpop.xlane.xlu0 %391
        %393 = vadd.xlane.f32.xlu0 %v287
        %v394 = vpop.xlane.xlu0 %393
        %395 = vadd.xlane.f32.xlu0 %v290
        %v396 = vpop.xlane.xlu0 %395
        %397 = vadd.xlane.f32.xlu0 %v293
        %v398 = vpop.xlane.xlu0 %397
        %399 = vadd.xlane.f32.xlu0 %v296
        %v400 = vpop.xlane.xlu0 %399
        %401 = vadd.xlane.f32.xlu0 %v299
        %v402 = vpop.xlane.xlu0 %401
        %403 = vadd.xlane.f32.xlu0 %v302
        %v404 = vpop.xlane.xlu0 %403
        %405 = vadd.xlane.f32.xlu0 %v305
        %v406 = vpop.xlane.xlu0 %405
        %407 = vadd.xlane.f32.xlu0 %v308
        %v408 = vpop.xlane.xlu0 %407
        %409 = vadd.xlane.f32.xlu0 %v311
        %v410 = vpop.xlane.xlu0 %409
        %411 = vadd.xlane.f32.xlu0 %v314
        %v412 = vpop.xlane.xlu0 %411
        %v413 = vmul.f32 %v382, 0.015625
        %v414 = vmul.f32 %v384, 0.015625
        %v415 = vmul.f32 %v386, 0.015625
        %v416 = vmul.f32 %v388, 0.015625
        %v417 = vmul.f32 %v390, 0.015625
        %v418 = vmul.f32 %v392, 0.015625
        %v419 = vmul.f32 %v394, 0.015625
        %v420 = vmul.f32 %v396, 0.015625
        %v421 = vmul.f32 %v398, 0.015625
        %v422 = vmul.f32 %v400, 0.015625
        %v423 = vmul.f32 %v402, 0.015625
        %v424 = vmul.f32 %v404, 0.015625
        %v425 = vmul.f32 %v406, 0.015625
        %v426 = vmul.f32 %v408, 0.015625
        %v427 = vmul.f32 %v410, 0.015625
        %v428 = vmul.f32 %v412, 0.015625
        %v429 = vsub.f32 %v269, %v413
        %v430 = vsub.f32 %v272, %v414
        %v431 = vsub.f32 %v275, %v415
        %v432 = vsub.f32 %v278, %v416
        %v433 = vsub.f32 %v281, %v417
        %v434 = vsub.f32 %v284, %v418
        %v435 = vsub.f32 %v287, %v419
        %v436 = vsub.f32 %v290, %v420
        %v437 = vsub.f32 %v293, %v421
        %v438 = vsub.f32 %v296, %v422
        %v439 = vsub.f32 %v299, %v423
        %v440 = vsub.f32 %v302, %v424
        %v441 = vsub.f32 %v305, %v425
        %v442 = vsub.f32 %v308, %v426
        %v443 = vsub.f32 %v311, %v427
        %v444 = vsub.f32 %v314, %v428
        %v445 = vlaneseq
        %v446 = vand.u32 %v445, 127
        %vm447 = vcmp.lt.s32.totalorder %v446, 64
        %v448 = vsel %vm447, 1, 0
        %vm449 = vcmp.eq.s32.totalorder %v448, 1
        %v450 = vsel %vm449, %v429, 0.0
        %v451 = vsel %vm449, %v430, 0.0
        %v452 = vsel %vm449, %v431, 0.0
        %v453 = vsel %vm449, %v432, 0.0
        %v454 = vsel %vm449, %v433, 0.0
        %v455 = vsel %vm449, %v434, 0.0
        %v456 = vsel %vm449, %v435, 0.0
        %v457 = vsel %vm449, %v436, 0.0
        %v458 = vsel %vm449, %v437, 0.0
        %v459 = vsel %vm449, %v438, 0.0
        %v460 = vsel %vm449, %v439, 0.0
        %v461 = vsel %vm449, %v440, 0.0
        %v462 = vsel %vm449, %v441, 0.0
        %v463 = vsel %vm449, %v442, 0.0
        %v464 = vsel %vm449, %v443, 0.0
        %v465 = vsel %vm449, %v444, 0.0
        %v466 = vmul.f32 %v450, %v450
        %v467 = vmul.f32 %v451, %v451
        %v468 = vmul.f32 %v452, %v452
        %v469 = vmul.f32 %v453, %v453
        %v470 = vmul.f32 %v454, %v454
        %v471 = vmul.f32 %v455, %v455
        %v472 = vmul.f32 %v456, %v456
        %v473 = vmul.f32 %v457, %v457
        %v474 = vmul.f32 %v458, %v458
        %v475 = vmul.f32 %v459, %v459
        %v476 = vmul.f32 %v460, %v460
        %v477 = vmul.f32 %v461, %v461
        %v478 = vmul.f32 %v462, %v462
        %v479 = vmul.f32 %v463, %v463
        %v480 = vmul.f32 %v464, %v464
        %v481 = vmul.f32 %v465, %v465
        %482 = vadd.xlane.f32.xlu0 %v466
        %v483 = vpop.xlane.xlu0 %482
        %484 = vadd.xlane.f32.xlu0 %v467
        %v485 = vpop.xlane.xlu0 %484
        %486 = vadd.xlane.f32.xlu0 %v468
        %v487 = vpop.xlane.xlu0 %486
        %488 = vadd.xlane.f32.xlu0 %v469
        %v489 = vpop.xlane.xlu0 %488
        %490 = vadd.xlane.f32.xlu0 %v470
        %v491 = vpop.xlane.xlu0 %490
        %492 = vadd.xlane.f32.xlu0 %v471
        %v493 = vpop.xlane.xlu0 %492
        %494 = vadd.xlane.f32.xlu0 %v472
        %v495 = vpop.xlane.xlu0 %494
        %496 = vadd.xlane.f32.xlu0 %v473
        %v497 = vpop.xlane.xlu0 %496
        %498 = vadd.xlane.f32.xlu0 %v474
        %v499 = vpop.xlane.xlu0 %498
        %500 = vadd.xlane.f32.xlu0 %v475
        %v501 = vpop.xlane.xlu0 %500
        %502 = vadd.xlane.f32.xlu0 %v476
        %v503 = vpop.xlane.xlu0 %502
        %504 = vadd.xlane.f32.xlu0 %v477
        %v505 = vpop.xlane.xlu0 %504
        %506 = vadd.xlane.f32.xlu0 %v478
        %v507 = vpop.xlane.xlu0 %506
        %508 = vadd.xlane.f32.xlu0 %v479
        %v509 = vpop.xlane.xlu0 %508
        %510 = vadd.xlane.f32.xlu0 %v480
        %v511 = vpop.xlane.xlu0 %510
        %512 = vadd.xlane.f32.xlu0 %v481
        %v513 = vpop.xlane.xlu0 %512
        %v514 = vmul.f32 %v483, 0.015625
        %v515 = vmul.f32 %v485, 0.015625
        %v516 = vmul.f32 %v487, 0.015625
        %v517 = vmul.f32 %v489, 0.015625
        %v518 = vmul.f32 %v491, 0.015625
        %v519 = vmul.f32 %v493, 0.015625
        %v520 = vmul.f32 %v495, 0.015625
        %v521 = vmul.f32 %v497, 0.015625
        %v522 = vmul.f32 %v499, 0.015625
        %v523 = vmul.f32 %v501, 0.015625
        %v524 = vmul.f32 %v503, 0.015625
        %v525 = vmul.f32 %v505, 0.015625
        %v526 = vmul.f32 %v507, 0.015625
        %v527 = vmul.f32 %v509, 0.015625
        %v528 = vmul.f32 %v511, 0.015625
        %v529 = vmul.f32 %v513, 0.015625
        %v530 = vld [vmem:[%s2 + $0x1] sm:$0x1]
        %v531 = vld [vmem:[%s2 + $0x3] sm:$0x1]
        %v532 = vadd.f32 %v514, 1e-05
        %v533 = vadd.f32 %v515, 1e-05
        %v534 = vadd.f32 %v516, 1e-05
        %v535 = vadd.f32 %v517, 1e-05
        %v536 = vadd.f32 %v518, 1e-05
        %v537 = vadd.f32 %v519, 1e-05
        %v538 = vadd.f32 %v520, 1e-05
        %v539 = vadd.f32 %v521, 1e-05
        %v540 = vadd.f32 %v522, 1e-05
        %v541 = vadd.f32 %v523, 1e-05
        %v542 = vadd.f32 %v524, 1e-05
        %v543 = vadd.f32 %v525, 1e-05
        %v544 = vadd.f32 %v526, 1e-05
        %v545 = vadd.f32 %v527, 1e-05
        %v546 = vadd.f32 %v528, 1e-05
        %v547 = vadd.f32 %v529, 1e-05
        %v548 = vrsqrt.pop %v532
        %v549 = vmul.f32 %v548, %v532
        %v550 = vmul.f32 %v549, %v548
        %v551 = vmul.f32 0.5, %v550
        %v552 = vsub.f32 1.5, %v551
        %v553 = vmul.f32 %v548, %v552
        %vm554 = vweird.f32 %v532
        %vm555 = vweird.f32 %v548
        %vm556 = vmor %vm554, %vm555
        %v557 = vsel %vm556, %v548, %v553
        %v558 = vrsqrt.pop %v533
        %v559 = vmul.f32 %v558, %v533
        %v560 = vmul.f32 %v559, %v558
        %v561 = vmul.f32 0.5, %v560
        %v562 = vsub.f32 1.5, %v561
        %v563 = vmul.f32 %v558, %v562
        %vm564 = vweird.f32 %v533
        %vm565 = vweird.f32 %v558
        %vm566 = vmor %vm564, %vm565
        %v567 = vsel %vm566, %v558, %v563
        %v568 = vrsqrt.pop %v534
        %v569 = vmul.f32 %v568, %v534
        %v570 = vmul.f32 %v569, %v568
        %v571 = vmul.f32 0.5, %v570
        %v572 = vsub.f32 1.5, %v571
        %v573 = vmul.f32 %v568, %v572
        %vm574 = vweird.f32 %v534
        %vm575 = vweird.f32 %v568
        %vm576 = vmor %vm574, %vm575
        %v577 = vsel %vm576, %v568, %v573
        %v578 = vrsqrt.pop %v535
        %v579 = vmul.f32 %v578, %v535
        %v580 = vmul.f32 %v579, %v578
        %v581 = vmul.f32 0.5, %v580
        %v582 = vsub.f32 1.5, %v581
        %v583 = vmul.f32 %v578, %v582
        %vm584 = vweird.f32 %v535
        %vm585 = vweird.f32 %v578
        %vm586 = vmor %vm584, %vm585
        %v587 = vsel %vm586, %v578, %v583
        %v588 = vrsqrt.pop %v536
        %v589 = vmul.f32 %v588, %v536
        %v590 = vmul.f32 %v589, %v588
        %v591 = vmul.f32 0.5, %v590
        %v592 = vsub.f32 1.5, %v591
        %v593 = vmul.f32 %v588, %v592
        %vm594 = vweird.f32 %v536
        %vm595 = vweird.f32 %v588
        %vm596 = vmor %vm594, %vm595
        %v597 = vsel %vm596, %v588, %v593
        %v598 = vrsqrt.pop %v537
        %v599 = vmul.f32 %v598, %v537
        %v600 = vmul.f32 %v599, %v598
        %v601 = vmul.f32 0.5, %v600
        %v602 = vsub.f32 1.5, %v601
        %v603 = vmul.f32 %v598, %v602
        %vm604 = vweird.f32 %v537
        %vm605 = vweird.f32 %v598
        %vm606 = vmor %vm604, %vm605
        %v607 = vsel %vm606, %v598, %v603
        %v608 = vrsqrt.pop %v538
        %v609 = vmul.f32 %v608, %v538
        %v610 = vmul.f32 %v609, %v608
        %v611 = vmul.f32 0.5, %v610
        %v612 = vsub.f32 1.5, %v611
        %v613 = vmul.f32 %v608, %v612
        %vm614 = vweird.f32 %v538
        %vm615 = vweird.f32 %v608
        %vm616 = vmor %vm614, %vm615
        %v617 = vsel %vm616, %v608, %v613
        %v618 = vrsqrt.pop %v539
        %v619 = vmul.f32 %v618, %v539
        %v620 = vmul.f32 %v619, %v618
        %v621 = vmul.f32 0.5, %v620
        %v622 = vsub.f32 1.5, %v621
        %v623 = vmul.f32 %v618, %v622
        %vm624 = vweird.f32 %v539
        %vm625 = vweird.f32 %v618
        %vm626 = vmor %vm624, %vm625
        %v627 = vsel %vm626, %v618, %v623
        %v628 = vrsqrt.pop %v540
        %v629 = vmul.f32 %v628, %v540
        %v630 = vmul.f32 %v629, %v628
        %v631 = vmul.f32 0.5, %v630
        %v632 = vsub.f32 1.5, %v631
        %v633 = vmul.f32 %v628, %v632
        %vm634 = vweird.f32 %v540
        %vm635 = vweird.f32 %v628
        %vm636 = vmor %vm634, %vm635
        %v637 = vsel %vm636, %v628, %v633
        %v638 = vrsqrt.pop %v541
        %v639 = vmul.f32 %v638, %v541
        %v640 = vmul.f32 %v639, %v638
        %v641 = vmul.f32 0.5, %v640
        %v642 = vsub.f32 1.5, %v641
        %v643 = vmul.f32 %v638, %v642
        %vm644 = vweird.f32 %v541
        %vm645 = vweird.f32 %v638
        %vm646 = vmor %vm644, %vm645
        %v647 = vsel %vm646, %v638, %v643
        %v648 = vrsqrt.pop %v542
        %v649 = vmul.f32 %v648, %v542
        %v650 = vmul.f32 %v649, %v648
        %v651 = vmul.f32 0.5, %v650
        %v652 = vsub.f32 1.5, %v651
        %v653 = vmul.f32 %v648, %v652
        %vm654 = vweird.f32 %v542
        %vm655 = vweird.f32 %v648
        %vm656 = vmor %vm654, %vm655
        %v657 = vsel %vm656, %v648, %v653
        %v658 = vrsqrt.pop %v543
        %v659 = vmul.f32 %v658, %v543
        %v660 = vmul.f32 %v659, %v658
        %v661 = vmul.f32 0.5, %v660
        %v662 = vsub.f32 1.5, %v661
        %v663 = vmul.f32 %v658, %v662
        %vm664 = vweird.f32 %v543
        %vm665 = vweird.f32 %v658
        %vm666 = vmor %vm664, %vm665
        %v667 = vsel %vm666, %v658, %v663
        %v668 = vrsqrt.pop %v544
        %v669 = vmul.f32 %v668, %v544
        %v670 = vmul.f32 %v669, %v668
        %v671 = vmul.f32 0.5, %v670
        %v672 = vsub.f32 1.5, %v671
        %v673 = vmul.f32 %v668, %v672
        %vm674 = vweird.f32 %v544
        %vm675 = vweird.f32 %v668
        %vm676 = vmor %vm674, %vm675
        %v677 = vsel %vm676, %v668, %v673
        %v678 = vrsqrt.pop %v545
        %v679 = vmul.f32 %v678, %v545
        %v680 = vmul.f32 %v679, %v678
        %v681 = vmul.f32 0.5, %v680
        %v682 = vsub.f32 1.5, %v681
        %v683 = vmul.f32 %v678, %v682
        %vm684 = vweird.f32 %v545
        %vm685 = vweird.f32 %v678
        %vm686 = vmor %vm684, %vm685
        %v687 = vsel %vm686, %v678, %v683
        %v688 = vrsqrt.pop %v546
        %v689 = vmul.f32 %v688, %v546
        %v690 = vmul.f32 %v689, %v688
        %v691 = vmul.f32 0.5, %v690
        %v692 = vsub.f32 1.5, %v691
        %v693 = vmul.f32 %v688, %v692
        %vm694 = vweird.f32 %v546
        %vm695 = vweird.f32 %v688
        %vm696 = vmor %vm694, %vm695
        %v697 = vsel %vm696, %v688, %v693
        %v698 = vrsqrt.pop %v547
        %v699 = vmul.f32 %v698, %v547
        %v700 = vmul.f32 %v699, %v698
        %v701 = vmul.f32 0.5, %v700
        %v702 = vsub.f32 1.5, %v701
        %v703 = vmul.f32 %v698, %v702
        %vm704 = vweird.f32 %v547
        %vm705 = vweird.f32 %v698
        %vm706 = vmor %vm704, %vm705
        %v707 = vsel %vm706, %v698, %v703
        %v708 = vmul.f32 %v450, %v557
        %v709 = vmul.f32 %v451, %v567
        %v710 = vmul.f32 %v452, %v577
        %v711 = vmul.f32 %v453, %v587
        %v712 = vmul.f32 %v454, %v597
        %v713 = vmul.f32 %v455, %v607
        %v714 = vmul.f32 %v456, %v617
        %v715 = vmul.f32 %v457, %v627
        %v716 = vmul.f32 %v458, %v637
        %v717 = vmul.f32 %v459, %v647
        %v718 = vmul.f32 %v460, %v657
        %v719 = vmul.f32 %v461, %v667
        %v720 = vmul.f32 %v462, %v677
        %v721 = vmul.f32 %v463, %v687
        %v722 = vmul.f32 %v464, %v697
        %v723 = vmul.f32 %v465, %v707
        %v724 = vperm.slane %v530, 0
        %v725 = vmul.f32 %v708, %v724
        %v726 = vmul.f32 %v709, %v724
        %v727 = vmul.f32 %v710, %v724
        %v728 = vmul.f32 %v711, %v724
        %v729 = vmul.f32 %v712, %v724
        %v730 = vmul.f32 %v713, %v724
        %v731 = vmul.f32 %v714, %v724
        %v732 = vmul.f32 %v715, %v724
        %v733 = vmul.f32 %v716, %v724
        %v734 = vmul.f32 %v717, %v724
        %v735 = vmul.f32 %v718, %v724
        %v736 = vmul.f32 %v719, %v724
        %v737 = vmul.f32 %v720, %v724
        %v738 = vmul.f32 %v721, %v724
        %v739 = vmul.f32 %v722, %v724
        %v740 = vmul.f32 %v723, %v724
        %v741 = vperm.slane %v531, 0
        %v742 = vadd.f32 %v725, %v741
        %v743 = vadd.f32 %v726, %v741
        %v744 = vadd.f32 %v727, %v741
        %v745 = vadd.f32 %v728, %v741
        %v746 = vadd.f32 %v729, %v741
        %v747 = vadd.f32 %v730, %v741
        %v748 = vadd.f32 %v731, %v741
        %v749 = vadd.f32 %v732, %v741
        %v750 = vadd.f32 %v733, %v741
        %v751 = vadd.f32 %v734, %v741
        %v752 = vadd.f32 %v735, %v741
        %v753 = vadd.f32 %v736, %v741
        %v754 = vadd.f32 %v737, %v741
        %v755 = vadd.f32 %v738, %v741
        %v756 = vadd.f32 %v739, %v741
        %v757 = vadd.f32 %v740, %v741
        %v758 = vmax.f32 %v742, 0.0
        %v759 = vmax.f32 %v743, 0.0
        %v760 = vmax.f32 %v744, 0.0
        %v761 = vmax.f32 %v745, 0.0
        %v762 = vmax.f32 %v746, 0.0
        %v763 = vmax.f32 %v747, 0.0
        %v764 = vmax.f32 %v748, 0.0
        %v765 = vmax.f32 %v749, 0.0
        %v766 = vmax.f32 %v750, 0.0
        %v767 = vmax.f32 %v751, 0.0
        %v768 = vmax.f32 %v752, 0.0
        %v769 = vmax.f32 %v753, 0.0
        %v770 = vmax.f32 %v754, 0.0
        %v771 = vmax.f32 %v755, 0.0
        %v772 = vmax.f32 %v756, 0.0
        %v773 = vmax.f32 %v757, 0.0
        %v774 = vadd.f32 %v758, %v334
        %v775 = vadd.f32 %v759, %v337
        %v776 = vadd.f32 %v760, %v340
        %v777 = vadd.f32 %v761, %v343
        %v778 = vadd.f32 %v762, %v346
        %v779 = vadd.f32 %v763, %v349
        %v780 = vadd.f32 %v764, %v352
        %v781 = vadd.f32 %v765, %v355
        %v782 = vadd.f32 %v766, %v358
        %v783 = vadd.f32 %v767, %v361
        %v784 = vadd.f32 %v768, %v364
        %v785 = vadd.f32 %v769, %v367
        %v786 = vadd.f32 %v770, %v370
        %v787 = vadd.f32 %v771, %v373
        %v788 = vadd.f32 %v772, %v376
        %v789 = vadd.f32 %v773, %v379
        %790 = vst [vmem:[%s164] sm:$0xff] %v774
        %791 = vst [vmem:[%s164 + $0x8] sm:$0xff] %v775
        %792 = vst [vmem:[%s164 + $0x10] sm:$0xff] %v776
        %793 = vst [vmem:[%s164 + $0x18] sm:$0xff] %v777
        %794 = vst [vmem:[%s164 + $0x20] sm:$0xff] %v778
        %795 = vst [vmem:[%s164 + $0x28] sm:$0xff] %v779
        %796 = vst [vmem:[%s164 + $0x30] sm:$0xff] %v780
        %797 = vst [vmem:[%s164 + $0x38] sm:$0xff] %v781
        %798 = vst [vmem:[%s164 + $0x40] sm:$0xff] %v782
        %799 = vst [vmem:[%s164 + $0x48] sm:$0xff] %v783
        %800 = vst [vmem:[%s164 + $0x50] sm:$0xff] %v784
        %801 = vst [vmem:[%s164 + $0x58] sm:$0xff] %v785
        %802 = vst [vmem:[%s164 + $0x60] sm:$0xff] %v786
        %803 = vst [vmem:[%s164 + $0x68] sm:$0xff] %v787
        %804 = vst [vmem:[%s164 + $0x70] sm:$0xff] %v788
        %805 = vst [vmem:[%s164 + $0x78] sm:$0xff] %v789
        %s806 = sand.u32 %s93, 1
        %s807 = scalar_lea.sflag [#allocation3], %s806
        %s808 = sand.u32 %s93, 1
        %s809 = smul.addr %s808, 128
        %s810 = scalar_lea.vmem [#allocation2], %s809
        // Predicated region
        $region33: #{tpu_custom_call.1} parent=31 // pred_check
          %p811 = pneg %p103
        $region34: #{tpu_custom_call.1} parent=31 // pred_check_branch
          %813 = sbr.rel (%p811) target = $region36
        $region35: #{tpu_custom_call.1} parent=31 // pred_region
          %s814 = smul.u32 16, %s17
          %816 = vsyncadd %s807, 0
          %s817 = smul.addr %s814, 8
          %s818 = scalar_lea.hbm %s3, %s817
          %s819 = sshll.u32 %s810, 4
          %s820 = int_to_ptr.vmem [resolvable:$true] %s819
          %s821 = sshll.u32 %s818, 4
          %s822 = int_to_ptr.hbm [resolvable:$true] %s821
          %827 = dma.vmem_to_hbm [thread:$0]  %s820, 2048, %s822, %s807, 128, 128, 8
        $region36: #{tpu_custom_call.1} parent=31 // pred_fallthru
          _
      $region32: #{tpu_custom_call.1} parent=5 // pred_fallthru
        _
      %p828 = scmp.le.s32.totalorder 2, %s12
      // Predicated region
      $region37: #{tpu_custom_call.1} parent=5 // pred_check
        %p829 = pneg %p828
      $region38: #{tpu_custom_call.1} parent=5 // pred_check_branch
        %831 = sbr.rel (%p829) target = $region40
      $region39: #{tpu_custom_call.1} parent=5 // pred_region
        %s832 = ssub.s32 %s12, 2
        // Predicated region
        $region41: #{tpu_custom_call.1} parent=39 // pred_check
          %p833 = pneg %p109
        $region42: #{tpu_custom_call.1} parent=39 // pred_check_branch
          %835 = sbr.rel (%p833) target = $region44
        $region43: #{tpu_custom_call.1} parent=39 // pred_region
          %s836 = sand.u32 %s94, 1
          %s837 = scalar_lea.sflag [#allocation3], %s836
          %s838 = sand.u32 %s94, 1
          %s839 = smul.addr %s838, 128
          %s840 = scalar_lea.vmem [#allocation2], %s839
          %842 = dma.done %s837, 2048
        $region44: #{tpu_custom_call.1} parent=39 // pred_fallthru
          _
      $region40: #{tpu_custom_call.1} parent=5 // pred_fallthru
        _
    $region6: #{tpu_custom_call.1} parent=1 // loop_footer
      %s16 = sadd.s32 1, %s12
    $region7: #{tpu_custom_call.1} parent=1 // loop_footer_branch
      %11 = sbr.rel target = $region3
    $region8: #{tpu_custom_call.1} parent=1 // loop_exit
      _
    %843 = vsyncpa [#allocation3], 1
    %s844 = scalar_lea.sflag [#allocation3], 1
    %845 = vsyncpa %s844, 1

</llo_original>
